<compile_context>
chip_gen: v6e
topology: v6e:2x2x1
jax: 0.10.0
libtpu: 0.0.40
codegen_flags: <defaults>
</compile_context>

<pallas_src>
import functools

import jax
import jax.numpy as jnp
from jax import lax
from jax.experimental import pallas as pl
from jax.experimental.pallas import tpu as pltpu

BN_EPS = 1e-5
LEAKY_SLOPE = 0.2
VMEM_LIMIT = 48 * 1024 * 1024        # safe on v7x (64 MiB physical) and v5e/v6e
VMEM_STEP_BUDGET = 20 * 1024 * 1024  # per-grid-step working-set target


def _leaky_relu(x):
    return jnp.where(x >= 0, x, LEAKY_SLOPE * x)


def _round_up(x, m):
    return (x + m - 1) // m * m


def _plan_tiles(n, hw, c_in, ndf, ndf2, in_itemsize, *,
                tm_target=16384, step_pixels_target=32768):
    """Pick pixel tile TM (multiple of 128), tile count, batch block, padded HW."""

    def step_bytes(tm_, bt_):
        x_blk = 2 * bt_ * c_in * tm_ * in_itemsize              # double-buffered input
        inter = bt_ * tm_ * (c_in * 2 + ndf * 6 + ndf2 * 12)    # conservative intermediates
        out_blk = 2 * bt_ * tm_ * 4                             # double-buffered output
        return x_blk + inter + out_blk

    hw_pad0 = _round_up(hw, 128)
    tm = min(hw_pad0, _round_up(tm_target, 128))
    while tm > 128 and step_bytes(tm, 1) > VMEM_STEP_BUDGET:
        tm = _round_up(tm // 2, 128)
    num_tiles = -(-hw_pad0 // tm)
    tm = _round_up(-(-hw_pad0 // num_tiles), 128)   # near-equal tiles, <128 px padding/tile
    hw_pad = tm * num_tiles

    bt = 1
    for cand in range(min(n, 8), 1, -1):            # batch blocking for small images
        if (n % cand == 0 and cand * tm <= step_pixels_target
                and step_bytes(tm, cand) <= VMEM_STEP_BUDGET):
            bt = cand
            break
    return tm, num_tiles, bt, hw_pad


def _hidden(x_tile, w1t_ref, b1_ref, w2t_ref):
    """conv1 + bias + LeakyReLU + conv2 on a channels-first (C_in, TM) tile."""
    xb = x_tile.astype(jnp.bfloat16)
    h1 = jnp.dot(w1t_ref[...], xb, preferred_element_type=jnp.float32)
    h1 = _leaky_relu(h1 + b1_ref[...])                       # f32 elementwise
    h2 = jnp.dot(w2t_ref[...], h1.astype(jnp.bfloat16),
                 preferred_element_type=jnp.float32)         # (2*ndf, TM) f32
    return h2


def _stats_kernel(x_ref, w1t_ref, b1_ref, w2t_ref, sum_ref, sq_ref, *,
                  bt, tm, hw_true, needs_mask):
    """Pass 1: per-grid-step partial per-channel sum / sum-of-squares of h2."""
    ndf2 = w2t_ref.shape[0]
    s = jnp.zeros((ndf2, 1), jnp.float32)
    q = jnp.zeros((ndf2, 1), jnp.float32)

    if needs_mask:
        j = pl.program_id(1)
        pix = j * tm + lax.broadcasted_iota(jnp.int32, (1, tm), 1)
        mask = (pix < hw_true).astype(jnp.float32)            # (1, TM) valid-pixel mask

    for b in range(bt):                                       # static unrolled batch block
        h2 = _hidden(x_ref[b], w1t_ref, b1_ref, w2t_ref)      # (2*ndf, TM)
        if needs_mask:
            h2 = h2 * mask                                    # zero padded pixels
        s = s + jnp.sum(h2, axis=1, keepdims=True)
        q = q + jnp.sum(h2 * h2, axis=1, keepdims=True)

    sum_ref[...] = s[None, None]                              # (1, 1, 2*ndf, 1)
    sq_ref[...] = q[None, None]


def _apply_kernel(x_ref, w1t_ref, b1_ref, w2t_ref, scale_ref, bias_ref,
                  w3_ref, out_ref, *, bt):
    """Pass 2: recompute h2, apply folded BN scale/bias + LeakyReLU + conv3."""
    for b in range(bt):
        h2 = _hidden(x_ref[b], w1t_ref, b1_ref, w2t_ref)      # (2*ndf, TM)
        h3 = _leaky_relu(h2 * scale_ref[...] + bias_ref[...])
        # conv3 (2*ndf -> 1): broadcast multiply + sublane reduce; lane-dense output.
        out = jnp.sum(h3 * w3_ref[...], axis=0, keepdims=True)  # (1, TM)
        out_ref[b] = out.astype(out_ref.dtype)


def pixel_discriminator_forward(x_nchw, params, *, tm_target=16384):
    """x_nchw: (N, C_in, H, W) float32/bfloat16 -> (N, 1, H, W) float32."""
    n, c_in, h, w = x_nchw.shape
    hw = h * w
    total_m = n * hw                                           # true pixel count for BN

    w1t, b1, w2t, gamma, beta, w3 = params
    ndf = w1t.shape[0]
    ndf2 = w2t.shape[0]

    in_itemsize = jnp.dtype(x_nchw.dtype).itemsize
    tm, num_tiles, bt, hw_pad = _plan_tiles(
        n, hw, c_in, ndf, ndf2, in_itemsize, tm_target=tm_target)
    needs_mask = hw_pad != hw
    gn = n // bt
    grid = (gn, num_tiles)

    # NCHW -> (N, C_in, H*W): pure reshape (no transpose); zero-pad ragged HW.
    x3 = x_nchw.reshape(n, c_in, hw)
    if needs_mask:
        x3 = jnp.pad(x3, ((0, 0), (0, 0), (0, hw_pad - hw)))
    w1t_b = w1t.astype(jnp.bfloat16)
    w2t_b = w2t.astype(jnp.bfloat16)

    const2 = lambda i, j: (0, 0)
    x_spec = pl.BlockSpec((bt, c_in, tm), lambda i, j: (i, 0, j))
    w1_spec = pl.BlockSpec((ndf, c_in), const2)
    b1_spec = pl.BlockSpec((ndf, 1), const2)
    w2_spec = pl.BlockSpec((ndf2, ndf), const2)
    vec_spec = pl.BlockSpec((ndf2, 1), const2)
    part_spec = pl.BlockSpec((1, 1, ndf2, 1), lambda i, j: (i, j, 0, 0))

    matmul_flops = 2 * total_m * (c_in * ndf + ndf * ndf2)

    # ---- Pass 1: grid-indexed partial BN statistics (megacore-friendly) ----
    sums, sqs = pl.pallas_call(
        functools.partial(_stats_kernel, bt=bt, tm=tm, hw_true=hw,
                          needs_mask=needs_mask),
        grid=grid,
        in_specs=[x_spec, w1_spec, b1_spec, w2_spec],
        out_specs=(part_spec, part_spec),
        out_shape=(jax.ShapeDtypeStruct((gn, num_tiles, ndf2, 1), jnp.float32),
                   jax.ShapeDtypeStruct((gn, num_tiles, ndf2, 1), jnp.float32)),
        compiler_params=pltpu.CompilerParams(
            dimension_semantics=("parallel", "parallel"),
            vmem_limit_bytes=VMEM_LIMIT),
        cost_estimate=pl.CostEstimate(
            flops=matmul_flops + 4 * total_m * ndf2,
            transcendentals=0,
            bytes_accessed=total_m * c_in * in_itemsize),
    )(x3, w1t_b, b1, w2t_b)

    # Tiny final reduction + BN fold in the wrapper (plain XLA on (ndf2,1)).
    s = jnp.sum(sums, axis=(0, 1))                             # (ndf2, 1)
    q = jnp.sum(sqs, axis=(0, 1))
    inv_m = jnp.float32(1.0 / total_m)
    mean = s * inv_m
    var = jnp.maximum(q * inv_m - mean * mean, 0.0)            # clamp f32 cancellation
    istd = lax.rsqrt(var + BN_EPS)
    scale = gamma * istd                                       # folded BN: y = h2*scale + bias
    bias = beta - mean * scale

    # ---- Pass 2: normalize + conv3, lane-dense output tiles ----
    out3 = pl.pallas_call(
        functools.partial(_apply_kernel, bt=bt),
        grid=grid,
        in_specs=[x_spec, w1_spec, b1_spec, w2_spec, vec_spec, vec_spec,
                  vec_spec],
        out_specs=pl.BlockSpec((bt, 1, tm), lambda i, j: (i, 0, j)),
        out_shape=jax.ShapeDtypeStruct((n, 1, hw_pad), jnp.float32),
        compiler_params=pltpu.CompilerParams(
            dimension_semantics=("parallel", "parallel"),
            vmem_limit_bytes=VMEM_LIMIT),
        cost_estimate=pl.CostEstimate(
            flops=matmul_flops + 2 * total_m * ndf2 + 4 * total_m * ndf2,
            transcendentals=0,
            bytes_accessed=total_m * (c_in * in_itemsize + 4)),
    )(x3, w1t_b, b1, w2t_b, scale, bias, w3)

    if needs_mask:
        out3 = out3[:, :, :hw]
    return out3.reshape(n, 1, h, w)


def init_params(key, input_nc, ndf):
    """Deterministic synthetic params, channels-first layout (C_out, C_in)."""
    k1, k2, k3, kb = jax.random.split(key, 4)
    w1t = jax.random.normal(k1, (ndf, input_nc), jnp.float32) * 0.1      # conv1
    b1 = jax.random.normal(kb, (ndf, 1), jnp.float32) * 0.1
    w2t = jax.random.normal(k2, (2 * ndf, ndf), jnp.float32) * 0.1       # conv2
    gamma = jnp.ones((2 * ndf, 1), jnp.float32)                          # BN affine init
    beta = jnp.zeros((2 * ndf, 1), jnp.float32)
    w3 = jax.random.normal(k3, (2 * ndf, 1), jnp.float32) * 0.1          # conv3
    return (w1t, b1, w2t, gamma, beta, w3)


def reference_forward(x_nchw, params):
    """Pure-JAX reference with the same bf16 matmul casts (for comparison)."""
    w1t, b1, w2t, gamma, beta, w3 = params
    n, c_in, h, w = x_nchw.shape
    x = x_nchw.reshape(n, c_in, h * w)
    h1 = jnp.einsum('oc,ncm->nom', w1t.astype(jnp.bfloat16),
                    x.astype(jnp.bfloat16),
                    preferred_element_type=jnp.float32)
    h1 = _leaky_relu(h1 + b1[None])
    h2 = jnp.einsum('oc,ncm->nom', w2t.astype(jnp.bfloat16),
                    h1.astype(jnp.bfloat16),
                    preferred_element_type=jnp.float32)
    mean = jnp.mean(h2, axis=(0, 2), keepdims=True)
    var = jnp.mean((h2 - mean) ** 2, axis=(0, 2), keepdims=True)
    h2n = (h2 - mean) * lax.rsqrt(var + BN_EPS) * gamma[None] + beta[None]
    h3 = _leaky_relu(h2n)
    out = jnp.sum(h3 * w3[None], axis=1, keepdims=True)
    return out.reshape(n, 1, h, w)


if __name__ == "__main__":
    key = jax.random.PRNGKey(0)
    kx, kp = jax.random.split(key)

    # Small shapes consistent with the module: batch=2, input_nc=4, 16x16, ndf=8.
    input_nc, ndf = 4, 8
    x = jax.random.normal(kx, (2, input_nc, 16, 16), jnp.float32)
    params = init_params(kp, input_nc, ndf)

    out = pixel_discriminator_forward(x, params)
    out = jax.block_until_ready(out)

    ref = reference_forward(x, params)
    assert out.shape == (2, 1, 16, 16), out.shape
    assert jnp.allclose(out, ref, atol=1e-2, rtol=1e-2), float(
        jnp.max(jnp.abs(out - ref)))

    print("KERNEL_OK")
</pallas_src>

<mosaic_0001>
module attributes {stable_mosaic.version = 11 : i64} {
  func.func @_stats_kernel(%arg0: i32, %arg1: i32, %arg2: memref<2x4x256xf32, #tpu.memory_space<vmem>>, %arg3: memref<8x4xbf16, #tpu.memory_space<vmem>>, %arg4: memref<8x1xf32, #tpu.memory_space<vmem>>, %arg5: memref<16x8xbf16, #tpu.memory_space<vmem>>, %arg6: memref<1x1x16x1xf32, #tpu.memory_space<vmem>>, %arg7: memref<1x1x16x1xf32, #tpu.memory_space<vmem>>) attributes {dimension_semantics = [#tpu.dimension_semantics<parallel>, #tpu.dimension_semantics<parallel>], iteration_bounds = array<i64: 1, 1>, scalar_prefetch = 0 : i64, scratch_operands = 0 : i64, tpu.core_type = #tpu.core_type<tc>, window_params = [{transform_indices = @transform_0, window_bounds = array<i64: 2, 4, 256>}, {pipeline_mode = #tpu.pipeline_mode<synchronous>, transform_indices = @transform_1, window_bounds = array<i64: 8, 4>}, {pipeline_mode = #tpu.pipeline_mode<synchronous>, transform_indices = @transform_2, window_bounds = array<i64: 8, 1>}, {pipeline_mode = #tpu.pipeline_mode<synchronous>, transform_indices = @transform_3, window_bounds = array<i64: 16, 8>}, {transform_indices = @transform_4, window_bounds = array<i64: 1, 1, 16, 1>}, {transform_indices = @transform_5, window_bounds = array<i64: 1, 1, 16, 1>}]} {
    %cst = arith.constant 0.000000e+00 : f32
    %0 = vector.broadcast %cst : f32 to vector<16x1xf32>
    %cst_0 = arith.constant 0.000000e+00 : f32
    %1 = vector.broadcast %cst_0 : f32 to vector<16x1xf32>
    %c0 = arith.constant 0 : index
    %c0_1 = arith.constant 0 : index
    %c0_2 = arith.constant 0 : index
    %2 = vector.load %arg2[%c0, %c0_1, %c0_2] : memref<2x4x256xf32, #tpu.memory_space<vmem>>, vector<1x4x256xf32>
    %3 = vector.shape_cast %2 : vector<1x4x256xf32> to vector<4x256xf32>
    %4 = arith.truncf %3 : vector<4x256xf32> to vector<4x256xbf16>
    %c0_3 = arith.constant 0 : index
    %c0_4 = arith.constant 0 : index
    %5 = vector.load %arg3[%c0_3, %c0_4] : memref<8x4xbf16, #tpu.memory_space<vmem>>, vector<8x4xbf16>
    %cst_5 = arith.constant dense<0.000000e+00> : vector<8x256xf32>
    %6 = tpu.matmul %5, %4, %cst_5 {dimension_numbers = #tpu.dot_dimension_numbers<[1], [0], [0], [1], [0, 0, 1, 1], [], []>} : vector<8x4xbf16>, vector<4x256xbf16>, vector<8x256xf32> -> vector<8x256xf32>
    %c0_6 = arith.constant 0 : index
    %c0_7 = arith.constant 0 : index
    %7 = vector.load %arg4[%c0_6, %c0_7] : memref<8x1xf32, #tpu.memory_space<vmem>>, vector<8x1xf32>
    %8 = vector.broadcast %7 : vector<8x1xf32> to vector<8x256xf32>
    %9 = arith.addf %6, %8 : vector<8x256xf32>
    %cst_8 = arith.constant 0.000000e+00 : f32
    %10 = vector.broadcast %cst_8 : f32 to vector<8x256xf32>
    %11 = arith.cmpf oge, %9, %10 : vector<8x256xf32>
    %cst_9 = arith.constant 2.000000e-01 : f32
    %12 = vector.broadcast %cst_9 : f32 to vector<8x256xf32>
    %13 = arith.mulf %12, %9 : vector<8x256xf32>
    %14 = arith.select %11, %9, %13 : vector<8x256xi1>, vector<8x256xf32>
    %c0_10 = arith.constant 0 : index
    %c0_11 = arith.constant 0 : index
    %15 = vector.load %arg5[%c0_10, %c0_11] : memref<16x8xbf16, #tpu.memory_space<vmem>>, vector<16x8xbf16>
    %16 = arith.truncf %14 : vector<8x256xf32> to vector<8x256xbf16>
    %cst_12 = arith.constant dense<0.000000e+00> : vector<16x256xf32>
    %17 = tpu.matmul %15, %16, %cst_12 {dimension_numbers = #tpu.dot_dimension_numbers<[1], [0], [0], [1], [0, 0, 1, 1], [], []>} : vector<16x8xbf16>, vector<8x256xbf16>, vector<16x256xf32> -> vector<16x256xf32>
    %cst_13 = arith.constant dense<0.000000e+00> : vector<16xf32>
    %18 = vector.multi_reduction <add>, %17, %cst_13 [1] : vector<16x256xf32> to vector<16xf32>
    %19 = vector.shape_cast %18 : vector<16xf32> to vector<16x1xf32>
    %20 = arith.addf %0, %19 : vector<16x1xf32>
    %21 = arith.mulf %17, %17 : vector<16x256xf32>
    %cst_14 = arith.constant dense<0.000000e+00> : vector<16xf32>
    %22 = vector.multi_reduction <add>, %21, %cst_14 [1] : vector<16x256xf32> to vector<16xf32>
    %23 = vector.shape_cast %22 : vector<16xf32> to vector<16x1xf32>
    %24 = arith.addf %1, %23 : vector<16x1xf32>
    %c1 = arith.constant 1 : index
    %c0_15 = arith.constant 0 : index
    %c0_16 = arith.constant 0 : index
    %25 = vector.load %arg2[%c1, %c0_15, %c0_16] : memref<2x4x256xf32, #tpu.memory_space<vmem>>, vector<1x4x256xf32>
    %26 = vector.shape_cast %25 : vector<1x4x256xf32> to vector<4x256xf32>
    %27 = arith.truncf %26 : vector<4x256xf32> to vector<4x256xbf16>
    %c0_17 = arith.constant 0 : index
    %c0_18 = arith.constant 0 : index
    %28 = vector.load %arg3[%c0_17, %c0_18] : memref<8x4xbf16, #tpu.memory_space<vmem>>, vector<8x4xbf16>
    %cst_19 = arith.constant dense<0.000000e+00> : vector<8x256xf32>
    %29 = tpu.matmul %28, %27, %cst_19 {dimension_numbers = #tpu.dot_dimension_numbers<[1], [0], [0], [1], [0, 0, 1, 1], [], []>} : vector<8x4xbf16>, vector<4x256xbf16>, vector<8x256xf32> -> vector<8x256xf32>
    %c0_20 = arith.constant 0 : index
    %c0_21 = arith.constant 0 : index
    %30 = vector.load %arg4[%c0_20, %c0_21] : memref<8x1xf32, #tpu.memory_space<vmem>>, vector<8x1xf32>
    %31 = vector.broadcast %30 : vector<8x1xf32> to vector<8x256xf32>
    %32 = arith.addf %29, %31 : vector<8x256xf32>
    %cst_22 = arith.constant 0.000000e+00 : f32
    %33 = vector.broadcast %cst_22 : f32 to vector<8x256xf32>
    %34 = arith.cmpf oge, %32, %33 : vector<8x256xf32>
    %cst_23 = arith.constant 2.000000e-01 : f32
    %35 = vector.broadcast %cst_23 : f32 to vector<8x256xf32>
    %36 = arith.mulf %35, %32 : vector<8x256xf32>
    %37 = arith.select %34, %32, %36 : vector<8x256xi1>, vector<8x256xf32>
    %c0_24 = arith.constant 0 : index
    %c0_25 = arith.constant 0 : index
    %38 = vector.load %arg5[%c0_24, %c0_25] : memref<16x8xbf16, #tpu.memory_space<vmem>>, vector<16x8xbf16>
    %39 = arith.truncf %37 : vector<8x256xf32> to vector<8x256xbf16>
    %cst_26 = arith.constant dense<0.000000e+00> : vector<16x256xf32>
    %40 = tpu.matmul %38, %39, %cst_26 {dimension_numbers = #tpu.dot_dimension_numbers<[1], [0], [0], [1], [0, 0, 1, 1], [], []>} : vector<16x8xbf16>, vector<8x256xbf16>, vector<16x256xf32> -> vector<16x256xf32>
    %cst_27 = arith.constant dense<0.000000e+00> : vector<16xf32>
    %41 = vector.multi_reduction <add>, %40, %cst_27 [1] : vector<16x256xf32> to vector<16xf32>
    %42 = vector.shape_cast %41 : vector<16xf32> to vector<16x1xf32>
    %43 = arith.addf %20, %42 : vector<16x1xf32>
    %44 = arith.mulf %40, %40 : vector<16x256xf32>
    %cst_28 = arith.constant dense<0.000000e+00> : vector<16xf32>
    %45 = vector.multi_reduction <add>, %44, %cst_28 [1] : vector<16x256xf32> to vector<16xf32>
    %46 = vector.shape_cast %45 : vector<16xf32> to vector<16x1xf32>
    %47 = arith.addf %24, %46 : vector<16x1xf32>
    %48 = vector.shape_cast %43 : vector<16x1xf32> to vector<1x1x16x1xf32>
    %c0_29 = arith.constant 0 : index
    %c0_30 = arith.constant 0 : index
    %c0_31 = arith.constant 0 : index
    %c0_32 = arith.constant 0 : index
    %49 = vector.load %arg6[%c0_29, %c0_30, %c0_31, %c0_32] : memref<1x1x16x1xf32, #tpu.memory_space<vmem>>, vector<1x1x16x1xf32>
    tpu.vector_store %arg6[%c0_29, %c0_30, %c0_31, %c0_32], %48 {strides = array<i32>} : memref<1x1x16x1xf32, #tpu.memory_space<vmem>>, vector<1x1x16x1xf32>,
    %50 = vector.shape_cast %47 : vector<16x1xf32> to vector<1x1x16x1xf32>
    %c0_33 = arith.constant 0 : index
    %c0_34 = arith.constant 0 : index
    %c0_35 = arith.constant 0 : index
    %c0_36 = arith.constant 0 : index
    %51 = vector.load %arg7[%c0_33, %c0_34, %c0_35, %c0_36] : memref<1x1x16x1xf32, #tpu.memory_space<vmem>>, vector<1x1x16x1xf32>
    tpu.vector_store %arg7[%c0_33, %c0_34, %c0_35, %c0_36], %50 {strides = array<i32>} : memref<1x1x16x1xf32, #tpu.memory_space<vmem>>, vector<1x1x16x1xf32>,
    return
  }
  func.func @transform_0(%arg0: i32, %arg1: i32) -> (i32, i32, i32) {
    %c0_i32 = arith.constant 0 : i32
    %c0_i32_0 = arith.constant 0 : i32
    return %arg0, %c0_i32, %arg1 : i32, i32, i32
  }
  func.func @transform_1(%arg0: i32, %arg1: i32) -> (i32, i32) {
    %c0_i32 = arith.constant 0 : i32
    %c0_i32_0 = arith.constant 0 : i32
    %c0_i32_1 = arith.constant 0 : i32
    return %c0_i32, %c0_i32_0 : i32, i32
  }
  func.func @transform_2(%arg0: i32, %arg1: i32) -> (i32, i32) {
    %c0_i32 = arith.constant 0 : i32
    %c0_i32_0 = arith.constant 0 : i32
    %c0_i32_1 = arith.constant 0 : i32
    return %c0_i32, %c0_i32_0 : i32, i32
  }
  func.func @transform_3(%arg0: i32, %arg1: i32) -> (i32, i32) {
    %c0_i32 = arith.constant 0 : i32
    %c0_i32_0 = arith.constant 0 : i32
    %c0_i32_1 = arith.constant 0 : i32
    return %c0_i32, %c0_i32_0 : i32, i32
  }
  func.func @transform_4(%arg0: i32, %arg1: i32) -> (i32, i32, i32, i32) {
    %c0_i32 = arith.constant 0 : i32
    %c0_i32_0 = arith.constant 0 : i32
    %c0_i32_1 = arith.constant 0 : i32
    return %arg0, %arg1, %c0_i32, %c0_i32_0 : i32, i32, i32, i32
  }
  func.func @transform_5(%arg0: i32, %arg1: i32) -> (i32, i32, i32, i32) {
    %c0_i32 = arith.constant 0 : i32
    %c0_i32_0 = arith.constant 0 : i32
    %c0_i32_1 = arith.constant 0 : i32
    return %arg0, %arg1, %c0_i32, %c0_i32_0 : i32, i32, i32, i32
  }
}

</mosaic_0001>

<llo_original>
// kernel: tpu_custom_call.1
$region0: #{tpu_custom_call.1}
  #allocation0 [shape = 'u32[]', space=smem, size = 0x4, offset = 0x4, fixed_abs, tag = 'smem constant byte address 0x4 - core index']
  #allocation1 [shape = 'u32[144,128]{1,0:T(1,128)}', space=vmem, size = 0x12000, scoped, tag = 'internal scratch']
  %s0 = inlined_call_operand.vmem [shape: f32[2,4,256], index: 0, kind: input, shape index: {}]
  %s1 = inlined_call_operand.vmem [shape: bf16[8,4], index: 1, kind: input, shape index: {}]
  %s2 = inlined_call_operand.vmem [shape: f32[8,1], index: 2, kind: input, shape index: {}]
  %s3 = inlined_call_operand.vmem [shape: bf16[16,8], index: 3, kind: input, shape index: {}]
  %s4 = inlined_call_operand.vmem [shape: f32[1,1,16,1], index: 4, kind: output, shape index: {0}]
  %s5 = inlined_call_operand.vmem [shape: f32[1,1,16,1], index: 5, kind: output, shape index: {1}]
  %6 = xla_tuple %s4, %s5
  %s7 = sld [smem:[#allocation0]]
  $region34: #{tpu_custom_call.1} parent=0
    _
  %s9 = ssub.s32 1, %s7
  %s10 = scalar_select 0, %s9, %s7
  // Predicated region
  $region2: #{tpu_custom_call.1} parent=0 // pred_check
    _
  $region3: #{tpu_custom_call.1} parent=0 // pred_check_branch
    %12 = sbr.rel (0) target = $region5
  $region4: #{tpu_custom_call.1} parent=0 // pred_region
    _
  $region5: #{tpu_custom_call.1} parent=0 // pred_fallthru
    _
  // Predicated region
  $region6: #{tpu_custom_call.1} parent=0 // pred_check
    _
  $region7: #{tpu_custom_call.1} parent=0 // pred_check_branch
    %14 = sbr.rel (0) target = $region9
  $region8: #{tpu_custom_call.1} parent=0 // pred_region
    _
  $region9: #{tpu_custom_call.1} parent=0 // pred_fallthru
    _
  // Predicated region
  $region10: #{tpu_custom_call.1} parent=0 // pred_check
    _
  $region11: #{tpu_custom_call.1} parent=0 // pred_check_branch
    %16 = sbr.rel (0) target = $region13
  $region12: #{tpu_custom_call.1} parent=0 // pred_region
    _
  $region13: #{tpu_custom_call.1} parent=0 // pred_fallthru
    _
  // Predicated region
  $region14: #{tpu_custom_call.1} parent=0 // pred_check
    _
  $region15: #{tpu_custom_call.1} parent=0 // pred_check_branch
    %18 = sbr.rel (0) target = $region17
  $region16: #{tpu_custom_call.1} parent=0 // pred_region
    _
  $region17: #{tpu_custom_call.1} parent=0 // pred_fallthru
    _
  %v20 = vld [vmem:[%s0] sm:$0xff]
  %v22 = vcombine.high %v20, %v20
  %v24 = vpack.c.bf16 %v20, %v20
  %v25 = vpack.c.bf16 %v22, %v22
  %v26 = vld [vmem:[%s1] sm:$0xf]
  %v27 = vld [vmem:[%s2] sm:$0xff]
  %29 = vset.pattern.permute.xlu0 0
  %30 = vperm.xlu0 %29, %v27
  %v31 = vpop.permute.xlu0 %30
  %vm33 = vcmask 31744
  %v35 = vsel %vm33, %v26, 0
  %vm37 = vcmask 1041408
  %v39 = vsel %vm37, %v24, 0
  %v42 = vsel %vm37, %v25, 0
  %44 = vmatprep.subr.bf16.mxu0 0
  %45 = vmatpush1.bf16.msra.mxu0 0
  %46 = vmatprep.subr.bf16.mxu0 0
  %47 = vmatpush1.bf16.msra.mxu0 0
  %48 = vmatprep.subr.bf16.mxu0 0
  %49 = vmatpush1.bf16.msra.mxu0 0
  %50 = vmatprep.subr.bf16.mxu0 0
  %51 = vmatpush1.bf16.msra.mxu0 0
  %52 = vmatprep.subr.bf16.mxu0 0
  %53 = vmatpush1.bf16.msra.mxu0 0
  %54 = vmatprep.subr.bf16.mxu0 0
  %55 = vmatpush1.bf16.msra.mxu0 0
  %56 = vmatprep.subr.bf16.mxu0 0
  %57 = vmatpush1.bf16.msra.mxu0 0
  %58 = vmatprep.subr.bf16.mxu0 %v42
  %59 = vmatpush1.bf16.msra.mxu0 %v39
  %60 = vmatprep.subr.bf16.mxu0 0
  %61 = vmatpush2.bf16.msra.mxu0 0
  %62 = vmatprep.subr.bf16.mxu0 0
  %63 = vmatpush2.bf16.msra.mxu0 0
  %64 = vmatprep.subr.bf16.mxu0 0
  %65 = vmatpush2.bf16.msra.mxu0 0
  %66 = vmatprep.subr.bf16.mxu0 0
  %67 = vmatpush2.bf16.msra.mxu0 0
  %68 = vmatprep.subr.bf16.mxu0 0
  %69 = vmatpush2.bf16.msra.mxu0 0
  %70 = vmatprep.subr.bf16.mxu0 0
  %71 = vmatpush2.bf16.msra.mxu0 0
  %72 = vmatprep.subr.bf16.mxu0 0
  %73 = vmatpush2.bf16.msra.mxu0 0
  %74 = vmatprep.subr.bf16.mxu0 0
  %75 = vmatpush2.bf16.msra.mxu0 0
  %76 = vmatprep.mubr.bf16.mxu0 0
  %77 = vmatmul.mubr.bf16.gmra.mxu0 %v35
  %v78 = vpop.f32.mrf.mxu0
  %v79 = vadd.f32 %v31, %v78
  %v80 = vpop.f32.mrf.mxu0
  %v81 = vadd.f32 %v31, %v80
  %v82 = vpop.f32.mrf.mxu0
  %v83 = vpop.f32.mrf.mxu0
  %84 = vdwg.mxu0
  %vm85 = vcmp.ge.f32.partialorder %v79, 0.0
  %vm86 = vcmp.ge.f32.partialorder %v81, 0.0
  %v87 = vmul.f32 %v79, 0.2
  %v88 = vmul.f32 %v81, 0.2
  %v89 = vsel %vm85, %v79, %v87
  %v90 = vsel %vm86, %v81, %v88
  %v91 = vld [vmem:[%s3] sm:$0xf]
  %v92 = vld [vmem:[%s3 + $0x4] sm:$0xf]
  %v93 = vpack.c.bf16 %v89, %v89
  %v94 = vpack.c.bf16 %v90, %v90
  %v97 = vunpack.c.l.b16 %v91
  %v98 = vunpack.c.l.b16 %v92
  %v99 = vpack.c.b16 %v98, %v97
  %vm100 = vcmask 64512
  %v102 = vsel %vm100, %v99, 0
  %vm104 = vcmask 1043456
  %v106 = vsel %vm104, %v93, 0
  %v109 = vsel %vm104, %v94, 0
  %111 = vmatprep.subr.bf16.mxu0 0
  %112 = vmatpush1.bf16.msra.mxu0 0
  %113 = vmatprep.subr.bf16.mxu0 0
  %114 = vmatpush1.bf16.msra.mxu0 0
  %115 = vmatprep.subr.bf16.mxu0 0
  %116 = vmatpush1.bf16.msra.mxu0 0
  %117 = vmatprep.subr.bf16.mxu0 0
  %118 = vmatpush1.bf16.msra.mxu0 0
  %119 = vmatprep.subr.bf16.mxu0 0
  %120 = vmatpush1.bf16.msra.mxu0 0
  %121 = vmatprep.subr.bf16.mxu0 0
  %122 = vmatpush1.bf16.msra.mxu0 0
  %123 = vmatprep.subr.bf16.mxu0 0
  %124 = vmatpush1.bf16.msra.mxu0 0
  %125 = vmatprep.subr.bf16.mxu0 %v109
  %126 = vmatpush1.bf16.msra.mxu0 %v106
  %127 = vmatprep.subr.bf16.mxu0 0
  %128 = vmatpush2.bf16.msra.mxu0 0
  %129 = vmatprep.subr.bf16.mxu0 0
  %130 = vmatpush2.bf16.msra.mxu0 0
  %131 = vmatprep.subr.bf16.mxu0 0
  %132 = vmatpush2.bf16.msra.mxu0 0
  %133 = vmatprep.subr.bf16.mxu0 0
  %134 = vmatpush2.bf16.msra.mxu0 0
  %135 = vmatprep.subr.bf16.mxu0 0
  %136 = vmatpush2.bf16.msra.mxu0 0
  %137 = vmatprep.subr.bf16.mxu0 0
  %138 = vmatpush2.bf16.msra.mxu0 0
  %139 = vmatprep.subr.bf16.mxu0 0
  %140 = vmatpush2.bf16.msra.mxu0 0
  %141 = vmatprep.subr.bf16.mxu0 0
  %142 = vmatpush2.bf16.msra.mxu0 0
  %143 = vmatprep.mubr.bf16.mxu0 0
  %144 = vmatmul.mubr.bf16.gmra.mxu0 %v102
  %v145 = vpop.f32.mrf.mxu0
  %v146 = vadd.f32 0.0, %v145
  %v147 = vpop.f32.mrf.mxu0
  %v148 = vadd.f32 0.0, %v147
  %v149 = vpop.f32.mrf.mxu0
  %v150 = vadd.f32 0.0, %v149
  %v151 = vpop.f32.mrf.mxu0
  %v152 = vadd.f32 0.0, %v151
  %153 = vdwg.mxu0
  %v154 = vadd.f32 %v146, %v148
  %155 = vadd.xlane.f32.xlu0 %v154
  %v156 = vpop.xlane.xlu0 %155
  %v157 = vadd.f32 %v150, %v152
  %158 = vadd.xlane.f32.xlu0 %v157
  %v159 = vpop.xlane.xlu0 %158
  %v160 = vadd.f32 %v156, 0.0
  %v161 = vadd.f32 %v159, 0.0
  %v162 = vmul.f32 %v146, %v146
  %v163 = vmul.f32 %v148, %v148
  %v164 = vmul.f32 %v150, %v150
  %v165 = vmul.f32 %v152, %v152
  %v166 = vadd.f32 %v162, %v163
  %167 = vadd.xlane.f32.xlu0 %v166
  %v168 = vpop.xlane.xlu0 %167
  %v169 = vadd.f32 %v164, %v165
  %170 = vadd.xlane.f32.xlu0 %v169
  %v171 = vpop.xlane.xlu0 %170
  %v172 = vadd.f32 %v168, 0.0
  %v173 = vadd.f32 %v171, 0.0
  %s174 = scalar_lea.vmem %s0, 8
  %v175 = vld [vmem:[%s174] sm:$0xff]
  %v177 = vcombine.high %v175, %v175
  %v179 = vpack.c.bf16 %v175, %v175
  %v180 = vpack.c.bf16 %v177, %v177
  %v182 = vsel %vm37, %v179, 0
  %v185 = vsel %vm37, %v180, 0
  %187 = vmatprep.subr.bf16.mxu0 0
  %188 = vmatpush1.bf16.msra.mxu0 0
  %189 = vmatprep.subr.bf16.mxu0 0
  %190 = vmatpush1.bf16.msra.mxu0 0
  %191 = vmatprep.subr.bf16.mxu0 0
  %192 = vmatpush1.bf16.msra.mxu0 0
  %193 = vmatprep.subr.bf16.mxu0 0
  %194 = vmatpush1.bf16.msra.mxu0 0
  %195 = vmatprep.subr.bf16.mxu0 0
  %196 = vmatpush1.bf16.msra.mxu0 0
  %197 = vmatprep.subr.bf16.mxu0 0
  %198 = vmatpush1.bf16.msra.mxu0 0
  %199 = vmatprep.subr.bf16.mxu0 0
  %200 = vmatpush1.bf16.msra.mxu0 0
  %201 = vmatprep.subr.bf16.mxu0 %v185
  %202 = vmatpush1.bf16.msra.mxu0 %v182
  %203 = vmatprep.subr.bf16.mxu0 0
  %204 = vmatpush2.bf16.msra.mxu0 0
  %205 = vmatprep.subr.bf16.mxu0 0
  %206 = vmatpush2.bf16.msra.mxu0 0
  %207 = vmatprep.subr.bf16.mxu0 0
  %208 = vmatpush2.bf16.msra.mxu0 0
  %209 = vmatprep.subr.bf16.mxu0 0
  %210 = vmatpush2.bf16.msra.mxu0 0
  %211 = vmatprep.subr.bf16.mxu0 0
  %212 = vmatpush2.bf16.msra.mxu0 0
  %213 = vmatprep.subr.bf16.mxu0 0
  %214 = vmatpush2.bf16.msra.mxu0 0
  %215 = vmatprep.subr.bf16.mxu0 0
  %216 = vmatpush2.bf16.msra.mxu0 0
  %217 = vmatprep.subr.bf16.mxu0 0
  %218 = vmatpush2.bf16.msra.mxu0 0
  %219 = vmatprep.mubr.bf16.mxu0 0
  %220 = vmatmul.mubr.bf16.gmra.mxu0 %v35
  %v221 = vpop.f32.mrf.mxu0
  %v222 = vadd.f32 %v31, %v221
  %v223 = vpop.f32.mrf.mxu0
  %v224 = vadd.f32 %v31, %v223
  %v225 = vpop.f32.mrf.mxu0
  %v226 = vpop.f32.mrf.mxu0
  %227 = vdwg.mxu0
  %vm228 = vcmp.ge.f32.partialorder %v222, 0.0
  %vm229 = vcmp.ge.f32.partialorder %v224, 0.0
  %v230 = vmul.f32 %v222, 0.2
  %v231 = vmul.f32 %v224, 0.2
  %v232 = vsel %vm228, %v222, %v230
  %v233 = vsel %vm229, %v224, %v231
  %v234 = vpack.c.bf16 %v232, %v232
  %v235 = vpack.c.bf16 %v233, %v233
  %v237 = vsel %vm104, %v234, 0
  %v240 = vsel %vm104, %v235, 0
  %242 = vmatprep.subr.bf16.mxu0 0
  %243 = vmatpush1.bf16.msra.mxu0 0
  %244 = vmatprep.subr.bf16.mxu0 0
  %245 = vmatpush1.bf16.msra.mxu0 0
  %246 = vmatprep.subr.bf16.mxu0 0
  %247 = vmatpush1.bf16.msra.mxu0 0
  %248 = vmatprep.subr.bf16.mxu0 0
  %249 = vmatpush1.bf16.msra.mxu0 0
  %250 = vmatprep.subr.bf16.mxu0 0
  %251 = vmatpush1.bf16.msra.mxu0 0
  %252 = vmatprep.subr.bf16.mxu0 0
  %253 = vmatpush1.bf16.msra.mxu0 0
  %254 = vmatprep.subr.bf16.mxu0 0
  %255 = vmatpush1.bf16.msra.mxu0 0
  %256 = vmatprep.subr.bf16.mxu0 %v240
  %257 = vmatpush1.bf16.msra.mxu0 %v237
  %258 = vmatprep.subr.bf16.mxu0 0
  %259 = vmatpush2.bf16.msra.mxu0 0
  %260 = vmatprep.subr.bf16.mxu0 0
  %261 = vmatpush2.bf16.msra.mxu0 0
  %262 = vmatprep.subr.bf16.mxu0 0
  %263 = vmatpush2.bf16.msra.mxu0 0
  %264 = vmatprep.subr.bf16.mxu0 0
  %265 = vmatpush2.bf16.msra.mxu0 0
  %266 = vmatprep.subr.bf16.mxu0 0
  %267 = vmatpush2.bf16.msra.mxu0 0
  %268 = vmatprep.subr.bf16.mxu0 0
  %269 = vmatpush2.bf16.msra.mxu0 0
  %270 = vmatprep.subr.bf16.mxu0 0
  %271 = vmatpush2.bf16.msra.mxu0 0
  %272 = vmatprep.subr.bf16.mxu0 0
  %273 = vmatpush2.bf16.msra.mxu0 0
  %274 = vmatprep.mubr.bf16.mxu0 0
  %275 = vmatmul.mubr.bf16.gmra.mxu0 %v102
  %v276 = vpop.f32.mrf.mxu0
  %v277 = vadd.f32 0.0, %v276
  %v278 = vpop.f32.mrf.mxu0
  %v279 = vadd.f32 0.0, %v278
  %v280 = vpop.f32.mrf.mxu0
  %v281 = vadd.f32 0.0, %v280
  %v282 = vpop.f32.mrf.mxu0
  %v283 = vadd.f32 0.0, %v282
  %284 = vdwg.mxu0
  %v285 = vadd.f32 %v277, %v279
  %286 = vadd.xlane.f32.xlu0 %v285
  %v287 = vpop.xlane.xlu0 %286
  %v288 = vadd.f32 %v281, %v283
  %289 = vadd.xlane.f32.xlu0 %v288
  %v290 = vpop.xlane.xlu0 %289
  %v291 = vadd.f32 %v160, %v287
  %v292 = vadd.f32 %v161, %v290
  %v293 = vmul.f32 %v277, %v277
  %v294 = vmul.f32 %v279, %v279
  %v295 = vmul.f32 %v281, %v281
  %v296 = vmul.f32 %v283, %v283
  %v297 = vadd.f32 %v293, %v294
  %298 = vadd.xlane.f32.xlu0 %v297
  %v299 = vpop.xlane.xlu0 %298
  %v300 = vadd.f32 %v295, %v296
  %301 = vadd.xlane.f32.xlu0 %v300
  %v302 = vpop.xlane.xlu0 %301
  %v303 = vadd.f32 %v172, %v299
  %v304 = vadd.f32 %v173, %v302
  %vm305 = vcmask 7168
  %306 = vst.msk [vmem:[%s4] sm:$0xff] %vm305, %v291
  %307 = vst.msk [vmem:[%s4 + $0x8] sm:$0xff] %vm305, %v292
  %308 = vst.msk [vmem:[%s5] sm:$0xff] %vm305, %v303
  %309 = vst.msk [vmem:[%s5 + $0x8] sm:$0xff] %vm305, %v304
  // Predicated region
  $region18: #{tpu_custom_call.1} parent=0 // pred_check
    _
  $region19: #{tpu_custom_call.1} parent=0 // pred_check_branch
    %311 = sbr.rel (0) target = $region21
  $region20: #{tpu_custom_call.1} parent=0 // pred_region
    _
  $region21: #{tpu_custom_call.1} parent=0 // pred_fallthru
    _
  // Predicated region
  $region22: #{tpu_custom_call.1} parent=0 // pred_check
    _
  $region23: #{tpu_custom_call.1} parent=0 // pred_check_branch
    %313 = sbr.rel (0) target = $region25
  $region24: #{tpu_custom_call.1} parent=0 // pred_region
    _
  $region25: #{tpu_custom_call.1} parent=0 // pred_fallthru
    _
  // Predicated region
  $region26: #{tpu_custom_call.1} parent=0 // pred_check
    _
  $region27: #{tpu_custom_call.1} parent=0 // pred_check_branch
    %315 = sbr.rel (0) target = $region29
  $region28: #{tpu_custom_call.1} parent=0 // pred_region
    _
  $region29: #{tpu_custom_call.1} parent=0 // pred_fallthru
    _
  // Predicated region
  $region30: #{tpu_custom_call.1} parent=0 // pred_check
    _
  $region31: #{tpu_custom_call.1} parent=0 // pred_check_branch
    %317 = sbr.rel (0) target = $region33
  $region32: #{tpu_custom_call.1} parent=0 // pred_region
    _
  $region33: #{tpu_custom_call.1} parent=0 // pred_fallthru
    _

</llo_original>
